<compile_context>
chip_gen: v7x
topology: tpu7x:2x2x1
jax: 0.10.0
libtpu: 0.0.40
codegen_flags: <defaults>
</compile_context>

<pallas_src>
import jax
import jax.numpy as jnp
from jax.experimental import pallas as pl
from jax.experimental.pallas import tpu as pltpu

EPS = 1e-5


def bn_relu_kernel(x_ref, gamma_ref, beta_ref, o_ref):
    # x_ref: (N, Cb, S) f32 block in natural NCHW layout (S = H*W on lanes).
    # gamma_ref / beta_ref: (Cb, 1) per-channel affine params.
    x = x_ref[...]
    n, _, s = x.shape
    inv = 1.0 / (n * s)

    # One-pass per-channel statistics over (N, S).
    s1 = jnp.sum(x, axis=2, keepdims=True)        # (N, Cb, 1)
    s2 = jnp.sum(x * x, axis=2, keepdims=True)    # (N, Cb, 1)
    s1 = jnp.sum(s1, axis=0, keepdims=True)       # (1, Cb, 1)
    s2 = jnp.sum(s2, axis=0, keepdims=True)       # (1, Cb, 1)
    mean = s1 * inv
    var = s2 * inv - mean * mean                  # biased variance (training BN)

    scale = gamma_ref[...][None] * jax.lax.rsqrt(var + EPS)   # (1, Cb, 1)
    shift = beta_ref[...][None] - mean * scale                # folded affine

    # Single fused normalize + affine + ReLU pass.
    o_ref[...] = jnp.maximum(x * scale + shift, 0.0).astype(o_ref.dtype)


def _pick_c_block(c, max_block=256):
    """Largest divisor of c that is a multiple of 8 and <= max_block, else c."""
    for nblk in range(1, c + 1):
        if c % nblk:
            continue
        cb = c // nblk
        if cb <= max_block and cb % 8 == 0:
            return cb
    return c  # full-dim block is always legal


def batchnorm_relu(x_nchw, gamma, beta):
    """x_nchw: (N, C, H, W) float32; gamma/beta: (C,) float32."""
    N, C, H, W = x_nchw.shape
    S = H * W

    x_ncs = x_nchw.reshape(N, C, S)                 # free: no transpose
    g = gamma.reshape(C, 1).astype(jnp.float32)
    b = beta.reshape(C, 1).astype(jnp.float32)

    c_blk = _pick_c_block(C)
    grid = (C // c_blk,)

    out_ncs = pl.pallas_call(
        bn_relu_kernel,
        out_shape=jax.ShapeDtypeStruct((N, C, S), x_nchw.dtype),
        grid=grid,
        in_specs=[
            pl.BlockSpec((N, c_blk, S), lambda c: (0, c, 0)),
            pl.BlockSpec((c_blk, 1), lambda c: (c, 0)),
            pl.BlockSpec((c_blk, 1), lambda c: (c, 0)),
        ],
        out_specs=pl.BlockSpec((N, c_blk, S), lambda c: (0, c, 0)),
        compiler_params=pltpu.CompilerParams(
            dimension_semantics=("parallel",)),
    )(x_ncs, g, b)

    return out_ncs.reshape(N, C, H, W)              # free: no transpose


def reference(x_nchw, gamma, beta):
    mean = jnp.mean(x_nchw, axis=(0, 2, 3), keepdims=True)
    var = jnp.mean((x_nchw - mean) ** 2, axis=(0, 2, 3), keepdims=True)
    y = (x_nchw - mean) * jax.lax.rsqrt(var + EPS)
    y = y * gamma[None, :, None, None] + beta[None, :, None, None]
    return jnp.maximum(y, 0.0)


if __name__ == "__main__":
    key = jax.random.PRNGKey(0)
    kx, kg, kb = jax.random.split(key, 3)

    N, C, H, W = 1, 864, 7, 7   # shape implied by the PyTorch module
    x = jax.random.normal(kx, (N, C, H, W), dtype=jnp.float32)
    # PyTorch default affine params are ones/zeros; perturb so the affine path
    # is actually exercised.
    gamma = 1.0 + 0.1 * jax.random.normal(kg, (C,), dtype=jnp.float32)
    beta = 0.1 * jax.random.normal(kb, (C,), dtype=jnp.float32)

    out = batchnorm_relu(x, gamma, beta)
    out = jax.block_until_ready(out)

    ref = reference(x, gamma, beta)
    assert out.shape == (N, C, H, W)
    err = float(jnp.max(jnp.abs(out - ref)))
    assert err < 1e-4, err

    print("KERNEL_OK")
</pallas_src>

<mosaic_0001>
module attributes {stable_mosaic.version = 11 : i64} {
  func.func @bn_relu_kernel(%arg0: i32, %arg1: memref<1x216x49xf32, #tpu.memory_space<vmem>>, %arg2: memref<216x1xf32, #tpu.memory_space<vmem>>, %arg3: memref<216x1xf32, #tpu.memory_space<vmem>>, %arg4: memref<1x216x49xf32, #tpu.memory_space<vmem>>) attributes {dimension_semantics = [#tpu.dimension_semantics<parallel>], iteration_bounds = array<i64: 4>, scalar_prefetch = 0 : i64, scratch_operands = 0 : i64, tpu.core_type = #tpu.core_type<tc>, window_params = [{transform_indices = @transform_0, window_bounds = array<i64: 1, 216, 49>}, {transform_indices = @transform_1, window_bounds = array<i64: 216, 1>}, {transform_indices = @transform_2, window_bounds = array<i64: 216, 1>}, {transform_indices = @transform_3, window_bounds = array<i64: 1, 216, 49>}]} {
    %c0 = arith.constant 0 : index
    %c0_0 = arith.constant 0 : index
    %c0_1 = arith.constant 0 : index
    %0 = vector.load %arg1[%c0, %c0_0, %c0_1] : memref<1x216x49xf32, #tpu.memory_space<vmem>>, vector<1x216x49xf32>
    %cst = arith.constant dense<0.000000e+00> : vector<1x216xf32>
    %1 = vector.multi_reduction <add>, %0, %cst [2] : vector<1x216x49xf32> to vector<1x216xf32>
    %2 = vector.shape_cast %1 : vector<1x216xf32> to vector<1x216x1xf32>
    %3 = arith.mulf %0, %0 : vector<1x216x49xf32>
    %cst_2 = arith.constant dense<0.000000e+00> : vector<1x216xf32>
    %4 = vector.multi_reduction <add>, %3, %cst_2 [2] : vector<1x216x49xf32> to vector<1x216xf32>
    %5 = vector.shape_cast %4 : vector<1x216xf32> to vector<1x216x1xf32>
    %cst_3 = arith.constant dense<0.000000e+00> : vector<216x1xf32>
    %6 = vector.multi_reduction <add>, %2, %cst_3 [0] : vector<1x216x1xf32> to vector<216x1xf32>
    %7 = vector.shape_cast %6 : vector<216x1xf32> to vector<1x216x1xf32>
    %cst_4 = arith.constant dense<0.000000e+00> : vector<216x1xf32>
    %8 = vector.multi_reduction <add>, %5, %cst_4 [0] : vector<1x216x1xf32> to vector<216x1xf32>
    %9 = vector.shape_cast %8 : vector<216x1xf32> to vector<1x216x1xf32>
    %cst_5 = arith.constant 0.0204081628 : f32
    %10 = vector.broadcast %cst_5 : f32 to vector<1x216x1xf32>
    %11 = arith.mulf %7, %10 : vector<1x216x1xf32>
    %cst_6 = arith.constant 0.0204081628 : f32
    %12 = vector.broadcast %cst_6 : f32 to vector<1x216x1xf32>
    %13 = arith.mulf %9, %12 : vector<1x216x1xf32>
    %14 = arith.mulf %11, %11 : vector<1x216x1xf32>
    %15 = arith.subf %13, %14 : vector<1x216x1xf32>
    %c0_7 = arith.constant 0 : index
    %c0_8 = arith.constant 0 : index
    %16 = vector.load %arg2[%c0_7, %c0_8] : memref<216x1xf32, #tpu.memory_space<vmem>>, vector<216x1xf32>
    %17 = vector.shape_cast %16 : vector<216x1xf32> to vector<1x216x1xf32>
    %cst_9 = arith.constant 9.99999974E-6 : f32
    %18 = vector.broadcast %cst_9 : f32 to vector<1x216x1xf32>
    %19 = arith.addf %15, %18 : vector<1x216x1xf32>
    %20 = math.rsqrt %19 : vector<1x216x1xf32>
    %21 = arith.mulf %17, %20 : vector<1x216x1xf32>
    %c0_10 = arith.constant 0 : index
    %c0_11 = arith.constant 0 : index
    %22 = vector.load %arg3[%c0_10, %c0_11] : memref<216x1xf32, #tpu.memory_space<vmem>>, vector<216x1xf32>
    %23 = vector.shape_cast %22 : vector<216x1xf32> to vector<1x216x1xf32>
    %24 = arith.mulf %11, %21 : vector<1x216x1xf32>
    %25 = arith.subf %23, %24 : vector<1x216x1xf32>
    %26 = vector.broadcast %21 : vector<1x216x1xf32> to vector<1x216x49xf32>
    %27 = arith.mulf %0, %26 : vector<1x216x49xf32>
    %28 = vector.broadcast %25 : vector<1x216x1xf32> to vector<1x216x49xf32>
    %29 = arith.addf %27, %28 : vector<1x216x49xf32>
    %cst_12 = arith.constant 0.000000e+00 : f32
    %30 = vector.broadcast %cst_12 : f32 to vector<1x216x49xf32>
    %31 = arith.maximumf %29, %30 : vector<1x216x49xf32>
    %c0_13 = arith.constant 0 : index
    %c0_14 = arith.constant 0 : index
    %c0_15 = arith.constant 0 : index
    %32 = vector.load %arg4[%c0_13, %c0_14, %c0_15] : memref<1x216x49xf32, #tpu.memory_space<vmem>>, vector<1x216x49xf32>
    tpu.vector_store %arg4[%c0_13, %c0_14, %c0_15], %31 {strides = array<i32>} : memref<1x216x49xf32, #tpu.memory_space<vmem>>, vector<1x216x49xf32>,
    return
  }
  func.func @transform_0(%arg0: i32) -> (i32, i32, i32) {
    %c0_i32 = arith.constant 0 : i32
    %c0_i32_0 = arith.constant 0 : i32
    %c0_i32_1 = arith.constant 0 : i32
    return %c0_i32, %arg0, %c0_i32_0 : i32, i32, i32
  }
  func.func @transform_1(%arg0: i32) -> (i32, i32) {
    %c0_i32 = arith.constant 0 : i32
    %c0_i32_0 = arith.constant 0 : i32
    return %arg0, %c0_i32 : i32, i32
  }
  func.func @transform_2(%arg0: i32) -> (i32, i32) {
    %c0_i32 = arith.constant 0 : i32
    %c0_i32_0 = arith.constant 0 : i32
    return %arg0, %c0_i32 : i32, i32
  }
  func.func @transform_3(%arg0: i32) -> (i32, i32, i32) {
    %c0_i32 = arith.constant 0 : i32
    %c0_i32_0 = arith.constant 0 : i32
    %c0_i32_1 = arith.constant 0 : i32
    return %c0_i32, %arg0, %c0_i32_0 : i32, i32, i32
  }
}

</mosaic_0001>

<llo_original>
// kernel: tpu_custom_call.1
$region0: #{tpu_custom_call.1}
  #allocation0 [shape = 'u32[]', space=smem, size = 0x4, offset = 0x4, fixed_abs, tag = 'smem constant byte address 0x4 - core index']
  #allocation1 [shape = 'u32[144,128]{1,0:T(1,128)}', space=vmem, size = 0x12000, scoped, tag = 'internal scratch']
  %s0 = inlined_call_operand.vmem [shape: f32[1,864,49], index: 0, kind: input, shape index: {}]
  %s1 = inlined_call_operand.vmem [shape: f32[864,1], index: 1, kind: input, shape index: {}]
  %s2 = inlined_call_operand.vmem [shape: f32[864,1], index: 2, kind: input, shape index: {}]
  %s3 = inlined_call_operand.vmem [shape: f32[1,864,49], index: 3, kind: output, shape index: {}]
  %s4 = sld [smem:[#allocation0]]
  $region45: #{tpu_custom_call.1} parent=0
    _
  %s6 = ssub.s32 1, %s4
  %s7 = scalar_select 0, %s6, %s4
  loop: start=0, step=1, limit=6
  $region2: #{tpu_custom_call.1} parent=0 // loop_pre_header
    _
  $region3: #{tpu_custom_call.1} parent=0 // loop_header
    %s9 = sphi 0, %s13
    %p10 = scmp.ge.s32.totalorder %s9, 6
    %s19 = sphi 0, %s21
    %s22 = sphi 0, %s19
    %s23 = sphi 0, %s22
    %s39 = sphi 0, %s23
    %s45 = sphi 0, %s47
    %s48 = sphi 0, %s45
    %s49 = sphi 0, %s48
    %s65 = sphi 0, %s49
    %s71 = sphi 0, %s73
    %s74 = sphi 0, %s71
    %s75 = sphi 0, %s74
    %s91 = sphi 0, %s75
    %s97 = sphi 0, %s99
    %s100 = sphi 0, %s97
    %s101 = sphi 0, %s100
    %s117 = sphi 0, %s101
  $region4: #{tpu_custom_call.1} parent=0 // loop_header_branch
    %12 = sbr.rel (%p10) target = $region8
  $region5: #{tpu_custom_call.1} parent=0 // loop_body
    %s14 = ssub.s32 %s9, 1
    %s15 = ssub.s32 %s9, 2
    %s16 = sadd.s32 %s9, 1
    %s17 = ssub.s32 %s9, %s16
    %p18 = scmp.eq.s32.totalorder %s17, 0
    %s20 = sadd.s32 %s19, 1
    %s21 = scalar_select %p18, %s19, %s20
    %p24 = pneg %p18
    %p25 = scmp.eq.s32.totalorder %s9, 3
    %p26 = por %p24, %p25
    %p27 = scmp.ne.s32.totalorder %s19, %s22
    %p28 = scmp.eq.s32.totalorder %s9, 0
    %p29 = por %p27, %p28
    %p30 = scmp.ne.s32.totalorder %s19, %s22
    %p31 = scmp.eq.s32.totalorder %s14, 3
    %p32 = por %p30, %p31
    %p33 = scmp.ne.s32.totalorder %s22, %s23
    %p34 = scmp.eq.s32.totalorder %s14, 0
    %p35 = por %p33, %p34
    %p36 = scmp.ne.s32.totalorder %s22, %s23
    %p37 = scmp.eq.s32.totalorder %s15, 3
    %p38 = por %p36, %p37
    %p40 = scmp.ne.s32.totalorder %s23, %s39
    %p41 = scmp.eq.s32.totalorder %s15, 0
    %p42 = por %p40, %p41
    %s43 = ssub.s32 %s9, %s16
    %p44 = scmp.eq.s32.totalorder %s43, 0
    %s46 = sadd.s32 %s45, 1
    %s47 = scalar_select %p44, %s45, %s46
    %p50 = pneg %p44
    %p51 = scmp.eq.s32.totalorder %s9, 3
    %p52 = por %p50, %p51
    %p53 = scmp.ne.s32.totalorder %s45, %s48
    %p54 = scmp.eq.s32.totalorder %s9, 0
    %p55 = por %p53, %p54
    %p56 = scmp.ne.s32.totalorder %s45, %s48
    %p57 = scmp.eq.s32.totalorder %s14, 3
    %p58 = por %p56, %p57
    %p59 = scmp.ne.s32.totalorder %s48, %s49
    %p60 = scmp.eq.s32.totalorder %s14, 0
    %p61 = por %p59, %p60
    %p62 = scmp.ne.s32.totalorder %s48, %s49
    %p63 = scmp.eq.s32.totalorder %s15, 3
    %p64 = por %p62, %p63
    %p66 = scmp.ne.s32.totalorder %s49, %s65
    %p67 = scmp.eq.s32.totalorder %s15, 0
    %p68 = por %p66, %p67
    %s69 = ssub.s32 %s9, %s16
    %p70 = scmp.eq.s32.totalorder %s69, 0
    %s72 = sadd.s32 %s71, 1
    %s73 = scalar_select %p70, %s71, %s72
    %p76 = pneg %p70
    %p77 = scmp.eq.s32.totalorder %s9, 3
    %p78 = por %p76, %p77
    %p79 = scmp.ne.s32.totalorder %s71, %s74
    %p80 = scmp.eq.s32.totalorder %s9, 0
    %p81 = por %p79, %p80
    %p82 = scmp.ne.s32.totalorder %s71, %s74
    %p83 = scmp.eq.s32.totalorder %s14, 3
    %p84 = por %p82, %p83
    %p85 = scmp.ne.s32.totalorder %s74, %s75
    %p86 = scmp.eq.s32.totalorder %s14, 0
    %p87 = por %p85, %p86
    %p88 = scmp.ne.s32.totalorder %s74, %s75
    %p89 = scmp.eq.s32.totalorder %s15, 3
    %p90 = por %p88, %p89
    %p92 = scmp.ne.s32.totalorder %s75, %s91
    %p93 = scmp.eq.s32.totalorder %s15, 0
    %p94 = por %p92, %p93
    %s95 = ssub.s32 %s9, %s16
    %p96 = scmp.eq.s32.totalorder %s95, 0
    %s98 = sadd.s32 %s97, 1
    %s99 = scalar_select %p96, %s97, %s98
    %p102 = pneg %p96
    %p103 = scmp.eq.s32.totalorder %s9, 3
    %p104 = por %p102, %p103
    %p105 = scmp.ne.s32.totalorder %s97, %s100
    %p106 = scmp.eq.s32.totalorder %s9, 0
    %p107 = por %p105, %p106
    %p108 = scmp.ne.s32.totalorder %s97, %s100
    %p109 = scmp.eq.s32.totalorder %s14, 3
    %p110 = por %p108, %p109
    %p111 = scmp.ne.s32.totalorder %s100, %s101
    %p112 = scmp.eq.s32.totalorder %s14, 0
    %p113 = por %p111, %p112
    %p114 = scmp.ne.s32.totalorder %s100, %s101
    %p115 = scmp.eq.s32.totalorder %s15, 3
    %p116 = por %p114, %p115
    %p118 = scmp.ne.s32.totalorder %s101, %s117
    %p119 = scmp.eq.s32.totalorder %s15, 0
    %p120 = por %p118, %p119
    %p121 = scmp.le.s32.totalorder 1, %s9
    %p122 = scmp.lt.s32.totalorder %s9, 5
    %p123 = pnand %p121, %p122
    %p124 = pneg %p123
    // Predicated region
    $region9: #{tpu_custom_call.1} parent=5 // pred_check
      _
    $region10: #{tpu_custom_call.1} parent=5 // pred_check_branch
      %126 = sbr.rel (%p123) target = $region12
    $region11: #{tpu_custom_call.1} parent=5 // pred_region
      %s127 = ssub.s32 %s9, 1
    $region12: #{tpu_custom_call.1} parent=5 // pred_fallthru
      _
    %p128 = scmp.lt.s32.totalorder %s9, 4
    // Predicated region
    $region13: #{tpu_custom_call.1} parent=5 // pred_check
      %p129 = pneg %p128
    $region14: #{tpu_custom_call.1} parent=5 // pred_check_branch
      %131 = sbr.rel (%p129) target = $region16
    $region15: #{tpu_custom_call.1} parent=5 // pred_region
      // Predicated region
      $region17: #{tpu_custom_call.1} parent=15 // pred_check
        %p132 = pneg %p29
      $region18: #{tpu_custom_call.1} parent=15 // pred_check_branch
        %134 = sbr.rel (%p132) target = $region20
      $region19: #{tpu_custom_call.1} parent=15 // pred_region
        %s135 = smul.u32 27, %s9
        %p136 = scmp.lt.s32.totalorder %s135, 107
        %s137 = scalar_select %p136, %s135, 107
        %s138 = smul.addr %s137, 8
        %s139 = scalar_lea.vmem %s0, %s138
        %s140 = smul.u32 27, %s9
      $region20: #{tpu_custom_call.1} parent=15 // pred_fallthru
        _
      // Predicated region
      $region21: #{tpu_custom_call.1} parent=15 // pred_check
        %p141 = pneg %p55
      $region22: #{tpu_custom_call.1} parent=15 // pred_check_branch
        %143 = sbr.rel (%p141) target = $region24
      $region23: #{tpu_custom_call.1} parent=15 // pred_region
        %s144 = smul.u32 27, %s9
        %p145 = scmp.lt.s32.totalorder %s144, 107
        %s146 = scalar_select %p145, %s144, 107
        %s147 = smul.addr %s146, 8
        %s148 = scalar_lea.vmem %s1, %s147
        %s149 = smul.u32 27, %s9
      $region24: #{tpu_custom_call.1} parent=15 // pred_fallthru
        _
      // Predicated region
      $region25: #{tpu_custom_call.1} parent=15 // pred_check
        %p150 = pneg %p81
      $region26: #{tpu_custom_call.1} parent=15 // pred_check_branch
        %152 = sbr.rel (%p150) target = $region28
      $region27: #{tpu_custom_call.1} parent=15 // pred_region
        %s153 = smul.u32 27, %s9
        %p154 = scmp.lt.s32.totalorder %s153, 107
        %s155 = scalar_select %p154, %s153, 107
        %s156 = smul.addr %s155, 8
        %s157 = scalar_lea.vmem %s2, %s156
        %s158 = smul.u32 27, %s9
      $region28: #{tpu_custom_call.1} parent=15 // pred_fallthru
        _
    $region16: #{tpu_custom_call.1} parent=5 // pred_fallthru
      _
    %p159 = scmp.le.s32.totalorder 1, %s9
    %p160 = scmp.lt.s32.totalorder %s9, 5
    %p161 = pnand %p159, %p160
    %p162 = pneg %p161
    // Predicated region
    $region29: #{tpu_custom_call.1} parent=5 // pred_check
      _
    $region30: #{tpu_custom_call.1} parent=5 // pred_check_branch
      %164 = sbr.rel (%p161) target = $region32
    $region31: #{tpu_custom_call.1} parent=5 // pred_region
      %s165 = ssub.s32 %s9, 1
      %s166 = smul.u32 27, %s14
      %p167 = scmp.lt.s32.totalorder %s166, 107
      %s168 = scalar_select %p167, %s166, 107
      %s169 = smul.addr %s168, 8
      %s170 = scalar_lea.vmem %s0, %s169
      %p171 = pneg %p35
      %p172 = pneg %p32
      %s173 = smul.u32 27, %s14
      %p174 = scmp.lt.s32.totalorder %s173, 107
      %s175 = scalar_select %p174, %s173, 107
      %s176 = smul.addr %s175, 8
      %s177 = scalar_lea.vmem %s1, %s176
      %p178 = pneg %p61
      %p179 = pneg %p58
      %s180 = smul.u32 27, %s14
      %p181 = scmp.lt.s32.totalorder %s180, 107
      %s182 = scalar_select %p181, %s180, 107
      %s183 = smul.addr %s182, 8
      %s184 = scalar_lea.vmem %s2, %s183
      %p185 = pneg %p87
      %p186 = pneg %p84
      %p187 = pneg %p113
      %p188 = pneg %p110
      %s189 = smul.u32 27, %s14
      %p190 = scmp.lt.s32.totalorder %s189, 107
      %s191 = scalar_select %p190, %s189, 107
      %s192 = smul.addr %s191, 8
      %s193 = scalar_lea.vmem %s3, %s192
      %s194 = smul.u32 27, %s14
      %p195 = scmp.lt.s32.totalorder %s194, 107
      %s196 = scalar_select %p195, %s194, 107
      %s197 = smul.addr %s196, 8
      %s198 = scalar_lea.vmem %s0, %s197
      %s199 = smul.u32 27, %s14
      %s200 = smul.u32 27, %s14
      %p201 = scmp.lt.s32.totalorder %s200, 107
      %s202 = scalar_select %p201, %s200, 107
      %s203 = smul.addr %s202, 8
      %s204 = scalar_lea.vmem %s1, %s203
      %s205 = smul.u32 27, %s14
      %s206 = smul.u32 27, %s14
      %p207 = scmp.lt.s32.totalorder %s206, 107
      %s208 = scalar_select %p207, %s206, 107
      %s209 = smul.addr %s208, 8
      %s210 = scalar_lea.vmem %s2, %s209
      %s211 = smul.u32 27, %s14
      %s212 = smul.u32 27, %s14
      %p213 = scmp.lt.s32.totalorder %s212, 107
      %s214 = scalar_select %p213, %s212, 107
      %s215 = smul.addr %s214, 8
      %s216 = scalar_lea.vmem %s3, %s215
      %s217 = smul.u32 27, %s14
      %v218 = vld [vmem:[%s198] sm:$0xff]
      %v219 = vld [vmem:[%s198 + $0x8] sm:$0xff]
      %v220 = vld [vmem:[%s198 + $0x10] sm:$0xff]
      %v221 = vld [vmem:[%s198 + $0x18] sm:$0xff]
      %v222 = vld [vmem:[%s198 + $0x20] sm:$0xff]
      %v223 = vld [vmem:[%s198 + $0x28] sm:$0xff]
      %v224 = vld [vmem:[%s198 + $0x30] sm:$0xff]
      %v225 = vld [vmem:[%s198 + $0x38] sm:$0xff]
      %v226 = vld [vmem:[%s198 + $0x40] sm:$0xff]
      %v227 = vld [vmem:[%s198 + $0x48] sm:$0xff]
      %v228 = vld [vmem:[%s198 + $0x50] sm:$0xff]
      %v229 = vld [vmem:[%s198 + $0x58] sm:$0xff]
      %v230 = vld [vmem:[%s198 + $0x60] sm:$0xff]
      %v231 = vld [vmem:[%s198 + $0x68] sm:$0xff]
      %v232 = vld [vmem:[%s198 + $0x70] sm:$0xff]
      %v233 = vld [vmem:[%s198 + $0x78] sm:$0xff]
      %v234 = vld [vmem:[%s198 + $0x80] sm:$0xff]
      %v235 = vld [vmem:[%s198 + $0x88] sm:$0xff]
      %v236 = vld [vmem:[%s198 + $0x90] sm:$0xff]
      %v237 = vld [vmem:[%s198 + $0x98] sm:$0xff]
      %v238 = vld [vmem:[%s198 + $0xa0] sm:$0xff]
      %v239 = vld [vmem:[%s198 + $0xa8] sm:$0xff]
      %v240 = vld [vmem:[%s198 + $0xb0] sm:$0xff]
      %v241 = vld [vmem:[%s198 + $0xb8] sm:$0xff]
      %v242 = vld [vmem:[%s198 + $0xc0] sm:$0xff]
      %v243 = vld [vmem:[%s198 + $0xc8] sm:$0xff]
      %v244 = vld [vmem:[%s198 + $0xd0] sm:$0xff]
      %vm245 = vcmask 400384
      %v246 = vsel %vm245, %v218, 0.0
      %247 = vadd.xlane.f32.xlu0 %v246
      %v248 = vpop.xlane.xlu0 %247
      %v249 = vsel %vm245, %v219, 0.0
      %250 = vadd.xlane.f32.xlu0 %v249
      %v251 = vpop.xlane.xlu0 %250
      %v252 = vsel %vm245, %v220, 0.0
      %253 = vadd.xlane.f32.xlu0 %v252
      %v254 = vpop.xlane.xlu0 %253
      %v255 = vsel %vm245, %v221, 0.0
      %256 = vadd.xlane.f32.xlu0 %v255
      %v257 = vpop.xlane.xlu0 %256
      %v258 = vsel %vm245, %v222, 0.0
      %259 = vadd.xlane.f32.xlu0 %v258
      %v260 = vpop.xlane.xlu0 %259
      %v261 = vsel %vm245, %v223, 0.0
      %262 = vadd.xlane.f32.xlu0 %v261
      %v263 = vpop.xlane.xlu0 %262
      %v264 = vsel %vm245, %v224, 0.0
      %265 = vadd.xlane.f32.xlu0 %v264
      %v266 = vpop.xlane.xlu0 %265
      %v267 = vsel %vm245, %v225, 0.0
      %268 = vadd.xlane.f32.xlu0 %v267
      %v269 = vpop.xlane.xlu0 %268
      %v270 = vsel %vm245, %v226, 0.0
      %271 = vadd.xlane.f32.xlu0 %v270
      %v272 = vpop.xlane.xlu0 %271
      %v273 = vsel %vm245, %v227, 0.0
      %274 = vadd.xlane.f32.xlu0 %v273
      %v275 = vpop.xlane.xlu0 %274
      %v276 = vsel %vm245, %v228, 0.0
      %277 = vadd.xlane.f32.xlu0 %v276
      %v278 = vpop.xlane.xlu0 %277
      %v279 = vsel %vm245, %v229, 0.0
      %280 = vadd.xlane.f32.xlu0 %v279
      %v281 = vpop.xlane.xlu0 %280
      %v282 = vsel %vm245, %v230, 0.0
      %283 = vadd.xlane.f32.xlu0 %v282
      %v284 = vpop.xlane.xlu0 %283
      %v285 = vsel %vm245, %v231, 0.0
      %286 = vadd.xlane.f32.xlu0 %v285
      %v287 = vpop.xlane.xlu0 %286
      %v288 = vsel %vm245, %v232, 0.0
      %289 = vadd.xlane.f32.xlu0 %v288
      %v290 = vpop.xlane.xlu0 %289
      %v291 = vsel %vm245, %v233, 0.0
      %292 = vadd.xlane.f32.xlu0 %v291
      %v293 = vpop.xlane.xlu0 %292
      %v294 = vsel %vm245, %v234, 0.0
      %295 = vadd.xlane.f32.xlu0 %v294
      %v296 = vpop.xlane.xlu0 %295
      %v297 = vsel %vm245, %v235, 0.0
      %298 = vadd.xlane.f32.xlu0 %v297
      %v299 = vpop.xlane.xlu0 %298
      %v300 = vsel %vm245, %v236, 0.0
      %301 = vadd.xlane.f32.xlu0 %v300
      %v302 = vpop.xlane.xlu0 %301
      %v303 = vsel %vm245, %v237, 0.0
      %304 = vadd.xlane.f32.xlu0 %v303
      %v305 = vpop.xlane.xlu0 %304
      %v306 = vsel %vm245, %v238, 0.0
      %307 = vadd.xlane.f32.xlu0 %v306
      %v308 = vpop.xlane.xlu0 %307
      %v309 = vsel %vm245, %v239, 0.0
      %310 = vadd.xlane.f32.xlu0 %v309
      %v311 = vpop.xlane.xlu0 %310
      %v312 = vsel %vm245, %v240, 0.0
      %313 = vadd.xlane.f32.xlu0 %v312
      %v314 = vpop.xlane.xlu0 %313
      %v315 = vsel %vm245, %v241, 0.0
      %316 = vadd.xlane.f32.xlu0 %v315
      %v317 = vpop.xlane.xlu0 %316
      %v318 = vsel %vm245, %v242, 0.0
      %319 = vadd.xlane.f32.xlu0 %v318
      %v320 = vpop.xlane.xlu0 %319
      %v321 = vsel %vm245, %v243, 0.0
      %322 = vadd.xlane.f32.xlu0 %v321
      %v323 = vpop.xlane.xlu0 %322
      %v324 = vsel %vm245, %v244, 0.0
      %325 = vadd.xlane.f32.xlu0 %v324
      %v326 = vpop.xlane.xlu0 %325
      %v327 = vmul.f32 %v218, %v218
      %v328 = vmul.f32 %v219, %v219
      %v329 = vmul.f32 %v220, %v220
      %v330 = vmul.f32 %v221, %v221
      %v331 = vmul.f32 %v222, %v222
      %v332 = vmul.f32 %v223, %v223
      %v333 = vmul.f32 %v224, %v224
      %v334 = vmul.f32 %v225, %v225
      %v335 = vmul.f32 %v226, %v226
      %v336 = vmul.f32 %v227, %v227
      %v337 = vmul.f32 %v228, %v228
      %v338 = vmul.f32 %v229, %v229
      %v339 = vmul.f32 %v230, %v230
      %v340 = vmul.f32 %v231, %v231
      %v341 = vmul.f32 %v232, %v232
      %v342 = vmul.f32 %v233, %v233
      %v343 = vmul.f32 %v234, %v234
      %v344 = vmul.f32 %v235, %v235
      %v345 = vmul.f32 %v236, %v236
      %v346 = vmul.f32 %v237, %v237
      %v347 = vmul.f32 %v238, %v238
      %v348 = vmul.f32 %v239, %v239
      %v349 = vmul.f32 %v240, %v240
      %v350 = vmul.f32 %v241, %v241
      %v351 = vmul.f32 %v242, %v242
      %v352 = vmul.f32 %v243, %v243
      %v353 = vmul.f32 %v244, %v244
      %v354 = vsel %vm245, %v327, 0.0
      %355 = vadd.xlane.f32.xlu0 %v354
      %v356 = vpop.xlane.xlu0 %355
      %v357 = vsel %vm245, %v328, 0.0
      %358 = vadd.xlane.f32.xlu0 %v357
      %v359 = vpop.xlane.xlu0 %358
      %v360 = vsel %vm245, %v329, 0.0
      %361 = vadd.xlane.f32.xlu0 %v360
      %v362 = vpop.xlane.xlu0 %361
      %v363 = vsel %vm245, %v330, 0.0
      %364 = vadd.xlane.f32.xlu0 %v363
      %v365 = vpop.xlane.xlu0 %364
      %v366 = vsel %vm245, %v331, 0.0
      %367 = vadd.xlane.f32.xlu0 %v366
      %v368 = vpop.xlane.xlu0 %367
      %v369 = vsel %vm245, %v332, 0.0
      %370 = vadd.xlane.f32.xlu0 %v369
      %v371 = vpop.xlane.xlu0 %370
      %v372 = vsel %vm245, %v333, 0.0
      %373 = vadd.xlane.f32.xlu0 %v372
      %v374 = vpop.xlane.xlu0 %373
      %v375 = vsel %vm245, %v334, 0.0
      %376 = vadd.xlane.f32.xlu0 %v375
      %v377 = vpop.xlane.xlu0 %376
      %v378 = vsel %vm245, %v335, 0.0
      %379 = vadd.xlane.f32.xlu0 %v378
      %v380 = vpop.xlane.xlu0 %379
      %v381 = vsel %vm245, %v336, 0.0
      %382 = vadd.xlane.f32.xlu0 %v381
      %v383 = vpop.xlane.xlu0 %382
      %v384 = vsel %vm245, %v337, 0.0
      %385 = vadd.xlane.f32.xlu0 %v384
      %v386 = vpop.xlane.xlu0 %385
      %v387 = vsel %vm245, %v338, 0.0
      %388 = vadd.xlane.f32.xlu0 %v387
      %v389 = vpop.xlane.xlu0 %388
      %v390 = vsel %vm245, %v339, 0.0
      %391 = vadd.xlane.f32.xlu0 %v390
      %v392 = vpop.xlane.xlu0 %391
      %v393 = vsel %vm245, %v340, 0.0
      %394 = vadd.xlane.f32.xlu0 %v393
      %v395 = vpop.xlane.xlu0 %394
      %v396 = vsel %vm245, %v341, 0.0
      %397 = vadd.xlane.f32.xlu0 %v396
      %v398 = vpop.xlane.xlu0 %397
      %v399 = vsel %vm245, %v342, 0.0
      %400 = vadd.xlane.f32.xlu0 %v399
      %v401 = vpop.xlane.xlu0 %400
      %v402 = vsel %vm245, %v343, 0.0
      %403 = vadd.xlane.f32.xlu0 %v402
      %v404 = vpop.xlane.xlu0 %403
      %v405 = vsel %vm245, %v344, 0.0
      %406 = vadd.xlane.f32.xlu0 %v405
      %v407 = vpop.xlane.xlu0 %406
      %v408 = vsel %vm245, %v345, 0.0
      %409 = vadd.xlane.f32.xlu0 %v408
      %v410 = vpop.xlane.xlu0 %409
      %v411 = vsel %vm245, %v346, 0.0
      %412 = vadd.xlane.f32.xlu0 %v411
      %v413 = vpop.xlane.xlu0 %412
      %v414 = vsel %vm245, %v347, 0.0
      %415 = vadd.xlane.f32.xlu0 %v414
      %v416 = vpop.xlane.xlu0 %415
      %v417 = vsel %vm245, %v348, 0.0
      %418 = vadd.xlane.f32.xlu0 %v417
      %v419 = vpop.xlane.xlu0 %418
      %v420 = vsel %vm245, %v349, 0.0
      %421 = vadd.xlane.f32.xlu0 %v420
      %v422 = vpop.xlane.xlu0 %421
      %v423 = vsel %vm245, %v350, 0.0
      %424 = vadd.xlane.f32.xlu0 %v423
      %v425 = vpop.xlane.xlu0 %424
      %v426 = vsel %vm245, %v351, 0.0
      %427 = vadd.xlane.f32.xlu0 %v426
      %v428 = vpop.xlane.xlu0 %427
      %v429 = vsel %vm245, %v352, 0.0
      %430 = vadd.xlane.f32.xlu0 %v429
      %v431 = vpop.xlane.xlu0 %430
      %v432 = vsel %vm245, %v353, 0.0
      %433 = vadd.xlane.f32.xlu0 %v432
      %v434 = vpop.xlane.xlu0 %433
      %v435 = vadd.f32 %v248, 0.0
      %v436 = vadd.f32 %v251, 0.0
      %v437 = vadd.f32 %v254, 0.0
      %v438 = vadd.f32 %v257, 0.0
      %v439 = vadd.f32 %v260, 0.0
      %v440 = vadd.f32 %v263, 0.0
      %v441 = vadd.f32 %v266, 0.0
      %v442 = vadd.f32 %v269, 0.0
      %v443 = vadd.f32 %v272, 0.0
      %v444 = vadd.f32 %v275, 0.0
      %v445 = vadd.f32 %v278, 0.0
      %v446 = vadd.f32 %v281, 0.0
      %v447 = vadd.f32 %v284, 0.0
      %v448 = vadd.f32 %v287, 0.0
      %v449 = vadd.f32 %v290, 0.0
      %v450 = vadd.f32 %v293, 0.0
      %v451 = vadd.f32 %v296, 0.0
      %v452 = vadd.f32 %v299, 0.0
      %v453 = vadd.f32 %v302, 0.0
      %v454 = vadd.f32 %v305, 0.0
      %v455 = vadd.f32 %v308, 0.0
      %v456 = vadd.f32 %v311, 0.0
      %v457 = vadd.f32 %v314, 0.0
      %v458 = vadd.f32 %v317, 0.0
      %v459 = vadd.f32 %v320, 0.0
      %v460 = vadd.f32 %v323, 0.0
      %v461 = vadd.f32 %v326, 0.0
      %v462 = vadd.f32 %v356, 0.0
      %v463 = vadd.f32 %v359, 0.0
      %v464 = vadd.f32 %v362, 0.0
      %v465 = vadd.f32 %v365, 0.0
      %v466 = vadd.f32 %v368, 0.0
      %v467 = vadd.f32 %v371, 0.0
      %v468 = vadd.f32 %v374, 0.0
      %v469 = vadd.f32 %v377, 0.0
      %v470 = vadd.f32 %v380, 0.0
      %v471 = vadd.f32 %v383, 0.0
      %v472 = vadd.f32 %v386, 0.0
      %v473 = vadd.f32 %v389, 0.0
      %v474 = vadd.f32 %v392, 0.0
      %v475 = vadd.f32 %v395, 0.0
      %v476 = vadd.f32 %v398, 0.0
      %v477 = vadd.f32 %v401, 0.0
      %v478 = vadd.f32 %v404, 0.0
      %v479 = vadd.f32 %v407, 0.0
      %v480 = vadd.f32 %v410, 0.0
      %v481 = vadd.f32 %v413, 0.0
      %v482 = vadd.f32 %v416, 0.0
      %v483 = vadd.f32 %v419, 0.0
      %v484 = vadd.f32 %v422, 0.0
      %v485 = vadd.f32 %v425, 0.0
      %v486 = vadd.f32 %v428, 0.0
      %v487 = vadd.f32 %v431, 0.0
      %v488 = vadd.f32 %v434, 0.0
      %v489 = vmul.f32 %v435, 0.020408163
      %v490 = vmul.f32 %v436, 0.020408163
      %v491 = vmul.f32 %v437, 0.020408163
      %v492 = vmul.f32 %v438, 0.020408163
      %v493 = vmul.f32 %v439, 0.020408163
      %v494 = vmul.f32 %v440, 0.020408163
      %v495 = vmul.f32 %v441, 0.020408163
      %v496 = vmul.f32 %v442, 0.020408163
      %v497 = vmul.f32 %v443, 0.020408163
      %v498 = vmul.f32 %v444, 0.020408163
      %v499 = vmul.f32 %v445, 0.020408163
      %v500 = vmul.f32 %v446, 0.020408163
      %v501 = vmul.f32 %v447, 0.020408163
      %v502 = vmul.f32 %v448, 0.020408163
      %v503 = vmul.f32 %v449, 0.020408163
      %v504 = vmul.f32 %v450, 0.020408163
      %v505 = vmul.f32 %v451, 0.020408163
      %v506 = vmul.f32 %v452, 0.020408163
      %v507 = vmul.f32 %v453, 0.020408163
      %v508 = vmul.f32 %v454, 0.020408163
      %v509 = vmul.f32 %v455, 0.020408163
      %v510 = vmul.f32 %v456, 0.020408163
      %v511 = vmul.f32 %v457, 0.020408163
      %v512 = vmul.f32 %v458, 0.020408163
      %v513 = vmul.f32 %v459, 0.020408163
      %v514 = vmul.f32 %v460, 0.020408163
      %v515 = vmul.f32 %v461, 0.020408163
      %v516 = vmul.f32 %v462, 0.020408163
      %v517 = vmul.f32 %v463, 0.020408163
      %v518 = vmul.f32 %v464, 0.020408163
      %v519 = vmul.f32 %v465, 0.020408163
      %v520 = vmul.f32 %v466, 0.020408163
      %v521 = vmul.f32 %v467, 0.020408163
      %v522 = vmul.f32 %v468, 0.020408163
      %v523 = vmul.f32 %v469, 0.020408163
      %v524 = vmul.f32 %v470, 0.020408163
      %v525 = vmul.f32 %v471, 0.020408163
      %v526 = vmul.f32 %v472, 0.020408163
      %v527 = vmul.f32 %v473, 0.020408163
      %v528 = vmul.f32 %v474, 0.020408163
      %v529 = vmul.f32 %v475, 0.020408163
      %v530 = vmul.f32 %v476, 0.020408163
      %v531 = vmul.f32 %v477, 0.020408163
      %v532 = vmul.f32 %v478, 0.020408163
      %v533 = vmul.f32 %v479, 0.020408163
      %v534 = vmul.f32 %v480, 0.020408163
      %v535 = vmul.f32 %v481, 0.020408163
      %v536 = vmul.f32 %v482, 0.020408163
      %v537 = vmul.f32 %v483, 0.020408163
      %v538 = vmul.f32 %v484, 0.020408163
      %v539 = vmul.f32 %v485, 0.020408163
      %v540 = vmul.f32 %v486, 0.020408163
      %v541 = vmul.f32 %v487, 0.020408163
      %v542 = vmul.f32 %v488, 0.020408163
      %v543 = vmul.f32 %v489, %v489
      %v544 = vmul.f32 %v490, %v490
      %v545 = vmul.f32 %v491, %v491
      %v546 = vmul.f32 %v492, %v492
      %v547 = vmul.f32 %v493, %v493
      %v548 = vmul.f32 %v494, %v494
      %v549 = vmul.f32 %v495, %v495
      %v550 = vmul.f32 %v496, %v496
      %v551 = vmul.f32 %v497, %v497
      %v552 = vmul.f32 %v498, %v498
      %v553 = vmul.f32 %v499, %v499
      %v554 = vmul.f32 %v500, %v500
      %v555 = vmul.f32 %v501, %v501
      %v556 = vmul.f32 %v502, %v502
      %v557 = vmul.f32 %v503, %v503
      %v558 = vmul.f32 %v504, %v504
      %v559 = vmul.f32 %v505, %v505
      %v560 = vmul.f32 %v506, %v506
      %v561 = vmul.f32 %v507, %v507
      %v562 = vmul.f32 %v508, %v508
      %v563 = vmul.f32 %v509, %v509
      %v564 = vmul.f32 %v510, %v510
      %v565 = vmul.f32 %v511, %v511
      %v566 = vmul.f32 %v512, %v512
      %v567 = vmul.f32 %v513, %v513
      %v568 = vmul.f32 %v514, %v514
      %v569 = vmul.f32 %v515, %v515
      %v570 = vsub.f32 %v516, %v543
      %v571 = vsub.f32 %v517, %v544
      %v572 = vsub.f32 %v518, %v545
      %v573 = vsub.f32 %v519, %v546
      %v574 = vsub.f32 %v520, %v547
      %v575 = vsub.f32 %v521, %v548
      %v576 = vsub.f32 %v522, %v549
      %v577 = vsub.f32 %v523, %v550
      %v578 = vsub.f32 %v524, %v551
      %v579 = vsub.f32 %v525, %v552
      %v580 = vsub.f32 %v526, %v553
      %v581 = vsub.f32 %v527, %v554
      %v582 = vsub.f32 %v528, %v555
      %v583 = vsub.f32 %v529, %v556
      %v584 = vsub.f32 %v530, %v557
      %v585 = vsub.f32 %v531, %v558
      %v586 = vsub.f32 %v532, %v559
      %v587 = vsub.f32 %v533, %v560
      %v588 = vsub.f32 %v534, %v561
      %v589 = vsub.f32 %v535, %v562
      %v590 = vsub.f32 %v536, %v563
      %v591 = vsub.f32 %v537, %v564
      %v592 = vsub.f32 %v538, %v565
      %v593 = vsub.f32 %v539, %v566
      %v594 = vsub.f32 %v540, %v567
      %v595 = vsub.f32 %v541, %v568
      %v596 = vsub.f32 %v542, %v569
      %v597 = vld [vmem:[%s204] sm:$0xff]
      %v598 = vld [vmem:[%s204 + $0x8] sm:$0xff]
      %v599 = vld [vmem:[%s204 + $0x10] sm:$0xff]
      %v600 = vld [vmem:[%s204 + $0x18] sm:$0xff]
      %v601 = vld [vmem:[%s204 + $0x20] sm:$0xff]
      %v602 = vld [vmem:[%s204 + $0x28] sm:$0xff]
      %v603 = vld [vmem:[%s204 + $0x30] sm:$0xff]
      %v604 = vld [vmem:[%s204 + $0x38] sm:$0xff]
      %v605 = vld [vmem:[%s204 + $0x40] sm:$0xff]
      %v606 = vld [vmem:[%s204 + $0x48] sm:$0xff]
      %v607 = vld [vmem:[%s204 + $0x50] sm:$0xff]
      %v608 = vld [vmem:[%s204 + $0x58] sm:$0xff]
      %v609 = vld [vmem:[%s204 + $0x60] sm:$0xff]
      %v610 = vld [vmem:[%s204 + $0x68] sm:$0xff]
      %v611 = vld [vmem:[%s204 + $0x70] sm:$0xff]
      %v612 = vld [vmem:[%s204 + $0x78] sm:$0xff]
      %v613 = vld [vmem:[%s204 + $0x80] sm:$0xff]
      %v614 = vld [vmem:[%s204 + $0x88] sm:$0xff]
      %v615 = vld [vmem:[%s204 + $0x90] sm:$0xff]
      %v616 = vld [vmem:[%s204 + $0x98] sm:$0xff]
      %v617 = vld [vmem:[%s204 + $0xa0] sm:$0xff]
      %v618 = vld [vmem:[%s204 + $0xa8] sm:$0xff]
      %v619 = vld [vmem:[%s204 + $0xb0] sm:$0xff]
      %v620 = vld [vmem:[%s204 + $0xb8] sm:$0xff]
      %v621 = vld [vmem:[%s204 + $0xc0] sm:$0xff]
      %v622 = vld [vmem:[%s204 + $0xc8] sm:$0xff]
      %v623 = vld [vmem:[%s204 + $0xd0] sm:$0xff]
      %v624 = vadd.f32 %v570, 1e-05
      %v625 = vadd.f32 %v571, 1e-05
      %v626 = vadd.f32 %v572, 1e-05
      %v627 = vadd.f32 %v573, 1e-05
      %v628 = vadd.f32 %v574, 1e-05
      %v629 = vadd.f32 %v575, 1e-05
      %v630 = vadd.f32 %v576, 1e-05
      %v631 = vadd.f32 %v577, 1e-05
      %v632 = vadd.f32 %v578, 1e-05
      %v633 = vadd.f32 %v579, 1e-05
      %v634 = vadd.f32 %v580, 1e-05
      %v635 = vadd.f32 %v581, 1e-05
      %v636 = vadd.f32 %v582, 1e-05
      %v637 = vadd.f32 %v583, 1e-05
      %v638 = vadd.f32 %v584, 1e-05
      %v639 = vadd.f32 %v585, 1e-05
      %v640 = vadd.f32 %v586, 1e-05
      %v641 = vadd.f32 %v587, 1e-05
      %v642 = vadd.f32 %v588, 1e-05
      %v643 = vadd.f32 %v589, 1e-05
      %v644 = vadd.f32 %v590, 1e-05
      %v645 = vadd.f32 %v591, 1e-05
      %v646 = vadd.f32 %v592, 1e-05
      %v647 = vadd.f32 %v593, 1e-05
      %v648 = vadd.f32 %v594, 1e-05
      %v649 = vadd.f32 %v595, 1e-05
      %v650 = vadd.f32 %v596, 1e-05
      %v651 = vrsqrt.pop %v624
      %v652 = vrsqrt.pop %v625
      %v653 = vrsqrt.pop %v626
      %v654 = vrsqrt.pop %v627
      %v655 = vrsqrt.pop %v628
      %v656 = vrsqrt.pop %v629
      %v657 = vrsqrt.pop %v630
      %v658 = vrsqrt.pop %v631
      %v659 = vrsqrt.pop %v632
      %v660 = vrsqrt.pop %v633
      %v661 = vrsqrt.pop %v634
      %v662 = vrsqrt.pop %v635
      %v663 = vrsqrt.pop %v636
      %v664 = vrsqrt.pop %v637
      %v665 = vrsqrt.pop %v638
      %v666 = vrsqrt.pop %v639
      %v667 = vrsqrt.pop %v640
      %v668 = vrsqrt.pop %v641
      %v669 = vrsqrt.pop %v642
      %v670 = vrsqrt.pop %v643
      %v671 = vrsqrt.pop %v644
      %v672 = vrsqrt.pop %v645
      %v673 = vrsqrt.pop %v646
      %v674 = vrsqrt.pop %v647
      %v675 = vrsqrt.pop %v648
      %v676 = vrsqrt.pop %v649
      %v677 = vrsqrt.pop %v650
      %v678 = vmul.f32 %v597, %v651
      %v679 = vmul.f32 %v598, %v652
      %v680 = vmul.f32 %v599, %v653
      %v681 = vmul.f32 %v600, %v654
      %v682 = vmul.f32 %v601, %v655
      %v683 = vmul.f32 %v602, %v656
      %v684 = vmul.f32 %v603, %v657
      %v685 = vmul.f32 %v604, %v658
      %v686 = vmul.f32 %v605, %v659
      %v687 = vmul.f32 %v606, %v660
      %v688 = vmul.f32 %v607, %v661
      %v689 = vmul.f32 %v608, %v662
      %v690 = vmul.f32 %v609, %v663
      %v691 = vmul.f32 %v610, %v664
      %v692 = vmul.f32 %v611, %v665
      %v693 = vmul.f32 %v612, %v666
      %v694 = vmul.f32 %v613, %v667
      %v695 = vmul.f32 %v614, %v668
      %v696 = vmul.f32 %v615, %v669
      %v697 = vmul.f32 %v616, %v670
      %v698 = vmul.f32 %v617, %v671
      %v699 = vmul.f32 %v618, %v672
      %v700 = vmul.f32 %v619, %v673
      %v701 = vmul.f32 %v620, %v674
      %v702 = vmul.f32 %v621, %v675
      %v703 = vmul.f32 %v622, %v676
      %v704 = vmul.f32 %v623, %v677
      %v705 = vld [vmem:[%s210] sm:$0xff]
      %v706 = vld [vmem:[%s210 + $0x8] sm:$0xff]
      %v707 = vld [vmem:[%s210 + $0x10] sm:$0xff]
      %v708 = vld [vmem:[%s210 + $0x18] sm:$0xff]
      %v709 = vld [vmem:[%s210 + $0x20] sm:$0xff]
      %v710 = vld [vmem:[%s210 + $0x28] sm:$0xff]
      %v711 = vld [vmem:[%s210 + $0x30] sm:$0xff]
      %v712 = vld [vmem:[%s210 + $0x38] sm:$0xff]
      %v713 = vld [vmem:[%s210 + $0x40] sm:$0xff]
      %v714 = vld [vmem:[%s210 + $0x48] sm:$0xff]
      %v715 = vld [vmem:[%s210 + $0x50] sm:$0xff]
      %v716 = vld [vmem:[%s210 + $0x58] sm:$0xff]
      %v717 = vld [vmem:[%s210 + $0x60] sm:$0xff]
      %v718 = vld [vmem:[%s210 + $0x68] sm:$0xff]
      %v719 = vld [vmem:[%s210 + $0x70] sm:$0xff]
      %v720 = vld [vmem:[%s210 + $0x78] sm:$0xff]
      %v721 = vld [vmem:[%s210 + $0x80] sm:$0xff]
      %v722 = vld [vmem:[%s210 + $0x88] sm:$0xff]
      %v723 = vld [vmem:[%s210 + $0x90] sm:$0xff]
      %v724 = vld [vmem:[%s210 + $0x98] sm:$0xff]
      %v725 = vld [vmem:[%s210 + $0xa0] sm:$0xff]
      %v726 = vld [vmem:[%s210 + $0xa8] sm:$0xff]
      %v727 = vld [vmem:[%s210 + $0xb0] sm:$0xff]
      %v728 = vld [vmem:[%s210 + $0xb8] sm:$0xff]
      %v729 = vld [vmem:[%s210 + $0xc0] sm:$0xff]
      %v730 = vld [vmem:[%s210 + $0xc8] sm:$0xff]
      %v731 = vld [vmem:[%s210 + $0xd0] sm:$0xff]
      %v732 = vmul.f32 %v489, %v678
      %v733 = vmul.f32 %v490, %v679
      %v734 = vmul.f32 %v491, %v680
      %v735 = vmul.f32 %v492, %v681
      %v736 = vmul.f32 %v493, %v682
      %v737 = vmul.f32 %v494, %v683
      %v738 = vmul.f32 %v495, %v684
      %v739 = vmul.f32 %v496, %v685
      %v740 = vmul.f32 %v497, %v686
      %v741 = vmul.f32 %v498, %v687
      %v742 = vmul.f32 %v499, %v688
      %v743 = vmul.f32 %v500, %v689
      %v744 = vmul.f32 %v501, %v690
      %v745 = vmul.f32 %v502, %v691
      %v746 = vmul.f32 %v503, %v692
      %v747 = vmul.f32 %v504, %v693
      %v748 = vmul.f32 %v505, %v694
      %v749 = vmul.f32 %v506, %v695
      %v750 = vmul.f32 %v507, %v696
      %v751 = vmul.f32 %v508, %v697
      %v752 = vmul.f32 %v509, %v698
      %v753 = vmul.f32 %v510, %v699
      %v754 = vmul.f32 %v511, %v700
      %v755 = vmul.f32 %v512, %v701
      %v756 = vmul.f32 %v513, %v702
      %v757 = vmul.f32 %v514, %v703
      %v758 = vmul.f32 %v515, %v704
      %v759 = vsub.f32 %v705, %v732
      %v760 = vsub.f32 %v706, %v733
      %v761 = vsub.f32 %v707, %v734
      %v762 = vsub.f32 %v708, %v735
      %v763 = vsub.f32 %v709, %v736
      %v764 = vsub.f32 %v710, %v737
      %v765 = vsub.f32 %v711, %v738
      %v766 = vsub.f32 %v712, %v739
      %v767 = vsub.f32 %v713, %v740
      %v768 = vsub.f32 %v714, %v741
      %v769 = vsub.f32 %v715, %v742
      %v770 = vsub.f32 %v716, %v743
      %v771 = vsub.f32 %v717, %v744
      %v772 = vsub.f32 %v718, %v745
      %v773 = vsub.f32 %v719, %v746
      %v774 = vsub.f32 %v720, %v747
      %v775 = vsub.f32 %v721, %v748
      %v776 = vsub.f32 %v722, %v749
      %v777 = vsub.f32 %v723, %v750
      %v778 = vsub.f32 %v724, %v751
      %v779 = vsub.f32 %v725, %v752
      %v780 = vsub.f32 %v726, %v753
      %v781 = vsub.f32 %v727, %v754
      %v782 = vsub.f32 %v728, %v755
      %v783 = vsub.f32 %v729, %v756
      %v784 = vsub.f32 %v730, %v757
      %v785 = vsub.f32 %v731, %v758
      %787 = vset.pattern.permute.xlu0 0
      %788 = vperm.xlu0 %787, %v678
      %v789 = vpop.permute.xlu0 %788
      %792 = vset.pattern.permute.xlu0 0
      %793 = vperm.xlu0 %792, %v679
      %v794 = vpop.permute.xlu0 %793
      %797 = vset.pattern.permute.xlu0 0
      %798 = vperm.xlu0 %797, %v680
      %v799 = vpop.permute.xlu0 %798
      %802 = vset.pattern.permute.xlu0 0
      %803 = vperm.xlu0 %802, %v681
      %v804 = vpop.permute.xlu0 %803
      %807 = vset.pattern.permute.xlu0 0
      %808 = vperm.xlu0 %807, %v682
      %v809 = vpop.permute.xlu0 %808
      %812 = vset.pattern.permute.xlu0 0
      %813 = vperm.xlu0 %812, %v683
      %v814 = vpop.permute.xlu0 %813
      %817 = vset.pattern.permute.xlu0 0
      %818 = vperm.xlu0 %817, %v684
      %v819 = vpop.permute.xlu0 %818
      %822 = vset.pattern.permute.xlu0 0
      %823 = vperm.xlu0 %822, %v685
      %v824 = vpop.permute.xlu0 %823
      %827 = vset.pattern.permute.xlu0 0
      %828 = vperm.xlu0 %827, %v686
      %v829 = vpop.permute.xlu0 %828
      %832 = vset.pattern.permute.xlu0 0
      %833 = vperm.xlu0 %832, %v687
      %v834 = vpop.permute.xlu0 %833
      %837 = vset.pattern.permute.xlu0 0
      %838 = vperm.xlu0 %837, %v688
      %v839 = vpop.permute.xlu0 %838
      %842 = vset.pattern.permute.xlu0 0
      %843 = vperm.xlu0 %842, %v689
      %v844 = vpop.permute.xlu0 %843
      %847 = vset.pattern.permute.xlu0 0
      %848 = vperm.xlu0 %847, %v690
      %v849 = vpop.permute.xlu0 %848
      %852 = vset.pattern.permute.xlu0 0
      %853 = vperm.xlu0 %852, %v691
      %v854 = vpop.permute.xlu0 %853
      %857 = vset.pattern.permute.xlu0 0
      %858 = vperm.xlu0 %857, %v692
      %v859 = vpop.permute.xlu0 %858
      %862 = vset.pattern.permute.xlu0 0
      %863 = vperm.xlu0 %862, %v693
      %v864 = vpop.permute.xlu0 %863
      %867 = vset.pattern.permute.xlu0 0
      %868 = vperm.xlu0 %867, %v694
      %v869 = vpop.permute.xlu0 %868
      %872 = vset.pattern.permute.xlu0 0
      %873 = vperm.xlu0 %872, %v695
      %v874 = vpop.permute.xlu0 %873
      %877 = vset.pattern.permute.xlu0 0
      %878 = vperm.xlu0 %877, %v696
      %v879 = vpop.permute.xlu0 %878
      %882 = vset.pattern.permute.xlu0 0
      %883 = vperm.xlu0 %882, %v697
      %v884 = vpop.permute.xlu0 %883
      %887 = vset.pattern.permute.xlu0 0
      %888 = vperm.xlu0 %887, %v698
      %v889 = vpop.permute.xlu0 %888
      %892 = vset.pattern.permute.xlu0 0
      %893 = vperm.xlu0 %892, %v699
      %v894 = vpop.permute.xlu0 %893
      %897 = vset.pattern.permute.xlu0 0
      %898 = vperm.xlu0 %897, %v700
      %v899 = vpop.permute.xlu0 %898
      %902 = vset.pattern.permute.xlu0 0
      %903 = vperm.xlu0 %902, %v701
      %v904 = vpop.permute.xlu0 %903
      %907 = vset.pattern.permute.xlu0 0
      %908 = vperm.xlu0 %907, %v702
      %v909 = vpop.permute.xlu0 %908
      %912 = vset.pattern.permute.xlu0 0
      %913 = vperm.xlu0 %912, %v703
      %v914 = vpop.permute.xlu0 %913
      %917 = vset.pattern.permute.xlu0 0
      %918 = vperm.xlu0 %917, %v704
      %v919 = vpop.permute.xlu0 %918
      %v921 = vmul.f32 %v218, %v789
      %v922 = vmul.f32 %v219, %v794
      %v923 = vmul.f32 %v220, %v799
      %v924 = vmul.f32 %v221, %v804
      %v925 = vmul.f32 %v222, %v809
      %v926 = vmul.f32 %v223, %v814
      %v927 = vmul.f32 %v224, %v819
      %v928 = vmul.f32 %v225, %v824
      %v929 = vmul.f32 %v226, %v829
      %v930 = vmul.f32 %v227, %v834
      %v931 = vmul.f32 %v228, %v839
      %v932 = vmul.f32 %v229, %v844
      %v933 = vmul.f32 %v230, %v849
      %v934 = vmul.f32 %v231, %v854
      %v935 = vmul.f32 %v232, %v859
      %v936 = vmul.f32 %v233, %v864
      %v937 = vmul.f32 %v234, %v869
      %v938 = vmul.f32 %v235, %v874
      %v939 = vmul.f32 %v236, %v879
      %v940 = vmul.f32 %v237, %v884
      %v941 = vmul.f32 %v238, %v889
      %v942 = vmul.f32 %v239, %v894
      %v943 = vmul.f32 %v240, %v899
      %v944 = vmul.f32 %v241, %v904
      %v945 = vmul.f32 %v242, %v909
      %v946 = vmul.f32 %v243, %v914
      %v947 = vmul.f32 %v244, %v919
      %949 = vset.pattern.permute.xlu0 0
      %950 = vperm.xlu0 %949, %v759
      %v951 = vpop.permute.xlu0 %950
      %954 = vset.pattern.permute.xlu0 0
      %955 = vperm.xlu0 %954, %v760
      %v956 = vpop.permute.xlu0 %955
      %959 = vset.pattern.permute.xlu0 0
      %960 = vperm.xlu0 %959, %v761
      %v961 = vpop.permute.xlu0 %960
      %964 = vset.pattern.permute.xlu0 0
      %965 = vperm.xlu0 %964, %v762
      %v966 = vpop.permute.xlu0 %965
      %969 = vset.pattern.permute.xlu0 0
      %970 = vperm.xlu0 %969, %v763
      %v971 = vpop.permute.xlu0 %970
      %974 = vset.pattern.permute.xlu0 0
      %975 = vperm.xlu0 %974, %v764
      %v976 = vpop.permute.xlu0 %975
      %979 = vset.pattern.permute.xlu0 0
      %980 = vperm.xlu0 %979, %v765
      %v981 = vpop.permute.xlu0 %980
      %984 = vset.pattern.permute.xlu0 0
      %985 = vperm.xlu0 %984, %v766
      %v986 = vpop.permute.xlu0 %985
      %989 = vset.pattern.permute.xlu0 0
      %990 = vperm.xlu0 %989, %v767
      %v991 = vpop.permute.xlu0 %990
      %994 = vset.pattern.permute.xlu0 0
      %995 = vperm.xlu0 %994, %v768
      %v996 = vpop.permute.xlu0 %995
      %999 = vset.pattern.permute.xlu0 0
      %1000 = vperm.xlu0 %999, %v769
      %v1001 = vpop.permute.xlu0 %1000
      %1004 = vset.pattern.permute.xlu0 0
      %1005 = vperm.xlu0 %1004, %v770
      %v1006 = vpop.permute.xlu0 %1005
      %1009 = vset.pattern.permute.xlu0 0
      %1010 = vperm.xlu0 %1009, %v771
      %v1011 = vpop.permute.xlu0 %1010
      %1014 = vset.pattern.permute.xlu0 0
      %1015 = vperm.xlu0 %1014, %v772
      %v1016 = vpop.permute.xlu0 %1015
      %1019 = vset.pattern.permute.xlu0 0
      %1020 = vperm.xlu0 %1019, %v773
      %v1021 = vpop.permute.xlu0 %1020
      %1024 = vset.pattern.permute.xlu0 0
      %1025 = vperm.xlu0 %1024, %v774
      %v1026 = vpop.permute.xlu0 %1025
      %1029 = vset.pattern.permute.xlu0 0
      %1030 = vperm.xlu0 %1029, %v775
      %v1031 = vpop.permute.xlu0 %1030
      %1034 = vset.pattern.permute.xlu0 0
      %1035 = vperm.xlu0 %1034, %v776
      %v1036 = vpop.permute.xlu0 %1035
      %1039 = vset.pattern.permute.xlu0 0
      %1040 = vperm.xlu0 %1039, %v777
      %v1041 = vpop.permute.xlu0 %1040
      %1044 = vset.pattern.permute.xlu0 0
      %1045 = vperm.xlu0 %1044, %v778
      %v1046 = vpop.permute.xlu0 %1045
      %1049 = vset.pattern.permute.xlu0 0
      %1050 = vperm.xlu0 %1049, %v779
      %v1051 = vpop.permute.xlu0 %1050
      %1054 = vset.pattern.permute.xlu0 0
      %1055 = vperm.xlu0 %1054, %v780
      %v1056 = vpop.permute.xlu0 %1055
      %1059 = vset.pattern.permute.xlu0 0
      %1060 = vperm.xlu0 %1059, %v781
      %v1061 = vpop.permute.xlu0 %1060
      %1064 = vset.pattern.permute.xlu0 0
      %1065 = vperm.xlu0 %1064, %v782
      %v1066 = vpop.permute.xlu0 %1065
      %1069 = vset.pattern.permute.xlu0 0
      %1070 = vperm.xlu0 %1069, %v783
      %v1071 = vpop.permute.xlu0 %1070
      %1074 = vset.pattern.permute.xlu0 0
      %1075 = vperm.xlu0 %1074, %v784
      %v1076 = vpop.permute.xlu0 %1075
      %1079 = vset.pattern.permute.xlu0 0
      %1080 = vperm.xlu0 %1079, %v785
      %v1081 = vpop.permute.xlu0 %1080
      %v1083 = vadd.f32 %v921, %v951
      %v1084 = vadd.f32 %v922, %v956
      %v1085 = vadd.f32 %v923, %v961
      %v1086 = vadd.f32 %v924, %v966
      %v1087 = vadd.f32 %v925, %v971
      %v1088 = vadd.f32 %v926, %v976
      %v1089 = vadd.f32 %v927, %v981
      %v1090 = vadd.f32 %v928, %v986
      %v1091 = vadd.f32 %v929, %v991
      %v1092 = vadd.f32 %v930, %v996
      %v1093 = vadd.f32 %v931, %v1001
      %v1094 = vadd.f32 %v932, %v1006
      %v1095 = vadd.f32 %v933, %v1011
      %v1096 = vadd.f32 %v934, %v1016
      %v1097 = vadd.f32 %v935, %v1021
      %v1098 = vadd.f32 %v936, %v1026
      %v1099 = vadd.f32 %v937, %v1031
      %v1100 = vadd.f32 %v938, %v1036
      %v1101 = vadd.f32 %v939, %v1041
      %v1102 = vadd.f32 %v940, %v1046
      %v1103 = vadd.f32 %v941, %v1051
      %v1104 = vadd.f32 %v942, %v1056
      %v1105 = vadd.f32 %v943, %v1061
      %v1106 = vadd.f32 %v944, %v1066
      %v1107 = vadd.f32 %v945, %v1071
      %v1108 = vadd.f32 %v946, %v1076
      %v1109 = vadd.f32 %v947, %v1081
      %v1110 = vmax.f32 %v1083, 0.0
      %v1111 = vmax.f32 %v1084, 0.0
      %v1112 = vmax.f32 %v1085, 0.0
      %v1113 = vmax.f32 %v1086, 0.0
      %v1114 = vmax.f32 %v1087, 0.0
      %v1115 = vmax.f32 %v1088, 0.0
      %v1116 = vmax.f32 %v1089, 0.0
      %v1117 = vmax.f32 %v1090, 0.0
      %v1118 = vmax.f32 %v1091, 0.0
      %v1119 = vmax.f32 %v1092, 0.0
      %v1120 = vmax.f32 %v1093, 0.0
      %v1121 = vmax.f32 %v1094, 0.0
      %v1122 = vmax.f32 %v1095, 0.0
      %v1123 = vmax.f32 %v1096, 0.0
      %v1124 = vmax.f32 %v1097, 0.0
      %v1125 = vmax.f32 %v1098, 0.0
      %v1126 = vmax.f32 %v1099, 0.0
      %v1127 = vmax.f32 %v1100, 0.0
      %v1128 = vmax.f32 %v1101, 0.0
      %v1129 = vmax.f32 %v1102, 0.0
      %v1130 = vmax.f32 %v1103, 0.0
      %v1131 = vmax.f32 %v1104, 0.0
      %v1132 = vmax.f32 %v1105, 0.0
      %v1133 = vmax.f32 %v1106, 0.0
      %v1134 = vmax.f32 %v1107, 0.0
      %v1135 = vmax.f32 %v1108, 0.0
      %v1136 = vmax.f32 %v1109, 0.0
      %1137 = vst.msk [vmem:[%s216] sm:$0xff] %vm245, %v1110
      %1138 = vst.msk [vmem:[%s216 + $0x8] sm:$0xff] %vm245, %v1111
      %1139 = vst.msk [vmem:[%s216 + $0x10] sm:$0xff] %vm245, %v1112
      %1140 = vst.msk [vmem:[%s216 + $0x18] sm:$0xff] %vm245, %v1113
      %1141 = vst.msk [vmem:[%s216 + $0x20] sm:$0xff] %vm245, %v1114
      %1142 = vst.msk [vmem:[%s216 + $0x28] sm:$0xff] %vm245, %v1115
      %1143 = vst.msk [vmem:[%s216 + $0x30] sm:$0xff] %vm245, %v1116
      %1144 = vst.msk [vmem:[%s216 + $0x38] sm:$0xff] %vm245, %v1117
      %1145 = vst.msk [vmem:[%s216 + $0x40] sm:$0xff] %vm245, %v1118
      %1146 = vst.msk [vmem:[%s216 + $0x48] sm:$0xff] %vm245, %v1119
      %1147 = vst.msk [vmem:[%s216 + $0x50] sm:$0xff] %vm245, %v1120
      %1148 = vst.msk [vmem:[%s216 + $0x58] sm:$0xff] %vm245, %v1121
      %1149 = vst.msk [vmem:[%s216 + $0x60] sm:$0xff] %vm245, %v1122
      %1150 = vst.msk [vmem:[%s216 + $0x68] sm:$0xff] %vm245, %v1123
      %1151 = vst.msk [vmem:[%s216 + $0x70] sm:$0xff] %vm245, %v1124
      %1152 = vst.msk [vmem:[%s216 + $0x78] sm:$0xff] %vm245, %v1125
      %1153 = vst.msk [vmem:[%s216 + $0x80] sm:$0xff] %vm245, %v1126
      %1154 = vst.msk [vmem:[%s216 + $0x88] sm:$0xff] %vm245, %v1127
      %1155 = vst.msk [vmem:[%s216 + $0x90] sm:$0xff] %vm245, %v1128
      %1156 = vst.msk [vmem:[%s216 + $0x98] sm:$0xff] %vm245, %v1129
      %1157 = vst.msk [vmem:[%s216 + $0xa0] sm:$0xff] %vm245, %v1130
      %1158 = vst.msk [vmem:[%s216 + $0xa8] sm:$0xff] %vm245, %v1131
      %1159 = vst.msk [vmem:[%s216 + $0xb0] sm:$0xff] %vm245, %v1132
      %1160 = vst.msk [vmem:[%s216 + $0xb8] sm:$0xff] %vm245, %v1133
      %1161 = vst.msk [vmem:[%s216 + $0xc0] sm:$0xff] %vm245, %v1134
      %1162 = vst.msk [vmem:[%s216 + $0xc8] sm:$0xff] %vm245, %v1135
      %1163 = vst.msk [vmem:[%s216 + $0xd0] sm:$0xff] %vm245, %v1136
      %s1164 = smul.u32 27, %s14
      %p1165 = scmp.lt.s32.totalorder %s1164, 107
      %s1166 = scalar_select %p1165, %s1164, 107
      %s1167 = smul.addr %s1166, 8
      %s1168 = scalar_lea.vmem %s3, %s1167
      // Predicated region
      $region33: #{tpu_custom_call.1} parent=31 // pred_check
        %p1169 = pneg %p110
      $region34: #{tpu_custom_call.1} parent=31 // pred_check_branch
        %1171 = sbr.rel (%p1169) target = $region36
      $region35: #{tpu_custom_call.1} parent=31 // pred_region
        %s1172 = smul.u32 27, %s14
      $region36: #{tpu_custom_call.1} parent=31 // pred_fallthru
        _
    $region32: #{tpu_custom_call.1} parent=5 // pred_fallthru
      _
    %p1173 = scmp.le.s32.totalorder 2, %s9
    // Predicated region
    $region37: #{tpu_custom_call.1} parent=5 // pred_check
      %p1174 = pneg %p1173
    $region38: #{tpu_custom_call.1} parent=5 // pred_check_branch
      %1176 = sbr.rel (%p1174) target = $region40
    $region39: #{tpu_custom_call.1} parent=5 // pred_region
      %s1177 = ssub.s32 %s9, 2
      // Predicated region
      $region41: #{tpu_custom_call.1} parent=39 // pred_check
        %p1178 = pneg %p116
      $region42: #{tpu_custom_call.1} parent=39 // pred_check_branch
        %1180 = sbr.rel (%p1178) target = $region44
      $region43: #{tpu_custom_call.1} parent=39 // pred_region
        %s1181 = smul.u32 27, %s15
        %p1182 = scmp.lt.s32.totalorder %s1181, 107
        %s1183 = scalar_select %p1182, %s1181, 107
        %s1184 = smul.addr %s1183, 8
        %s1185 = scalar_lea.vmem %s3, %s1184
      $region44: #{tpu_custom_call.1} parent=39 // pred_fallthru
        _
    $region40: #{tpu_custom_call.1} parent=5 // pred_fallthru
      _
  $region6: #{tpu_custom_call.1} parent=0 // loop_footer
    %s13 = sadd.s32 1, %s9
  $region7: #{tpu_custom_call.1} parent=0 // loop_footer_branch
    %8 = sbr.rel target = $region3
  $region8: #{tpu_custom_call.1} parent=0 // loop_exit
    _

</llo_original>
